<compile_context>
chip_gen: v6e
topology: v6e:2x2x1
jax: 0.10.0
libtpu: 0.0.40
codegen_flags: <defaults>
</compile_context>

<pallas_src>
import jax
import jax.numpy as jnp
from jax.experimental import pallas as pl
from jax.experimental.pallas import tpu as pltpu


# ----------------------------------------------------------------------------
# Generation-aware VMEM limit
# ----------------------------------------------------------------------------
def _vmem_limit_bytes():
    try:
        cap = int(pltpu.get_tpu_info().vmem_capacity_bytes)
        return int(min(100 * 1024 * 1024, (cap * 3) // 4))   # 48 MiB on v7x, 96 MiB on v5e/v6e
    except Exception:
        return 48 * 1024 * 1024                               # safe on every generation


_VMEM_LIMIT = _vmem_limit_bytes()


def _ru(x, m):
    return ((x + m - 1) // m) * m


# ----------------------------------------------------------------------------
# Per-tap gather ("shift") matrices for in-kernel 3x3 (and strided) convs
# ----------------------------------------------------------------------------
def _build_shift_mats(B, H, W, k, stride, pad, mi_p, mo_p):
    """S[t] (mo_p x mi_p, 0/1 bf16) s.t. (S[t] @ Xflat)[b,ho,wo] =
    X[b, ho*stride+dh-pad, wo*stride+dw-pad] (zero where the tap hits padding).
    Tap order: dh major, dw minor -- matches the weight layout below."""
    Ho = (H + 2 * pad - k) // stride + 1
    Wo = (W + 2 * pad - k) // stride + 1
    Mo = B * Ho * Wo
    idx = jnp.arange(Mo)
    b = idx // (Ho * Wo)
    rem = idx % (Ho * Wo)
    ho = rem // Wo
    wo = rem % Wo
    mats = []
    for dh in range(k):
        for dw in range(k):
            hi = ho * stride + dh - pad
            wi = wo * stride + dw - pad
            valid = (hi >= 0) & (hi < H) & (wi >= 0) & (wi < W)
            flat = (b * H + jnp.clip(hi, 0, H - 1)) * W + jnp.clip(wi, 0, W - 1)
            m = jax.nn.one_hot(flat, mi_p, dtype=jnp.float32)
            m = m * valid[:, None].astype(jnp.float32)
            m = jnp.pad(m, ((0, mo_p - Mo), (0, 0)))
            mats.append(m)
    return jnp.stack(mats).astype(jnp.bfloat16)   # (k*k, mo_p, mi_p)


# ----------------------------------------------------------------------------
# Fused conv-stack Pallas kernel (whole stack in one call, VMEM resident)
# ----------------------------------------------------------------------------
def _make_stack_kernel(stage_meta, has_s):
    """stage_meta: tuple of (ksize, cin_p, cout_p, rows_in_p, rows_out_p)."""
    n_stages = len(stage_meta)

    def kernel(*refs):
        # refs = x, [S], (w0, shift0), ..., (w_{n-1}, shift_{n-1}), out, [act scratch]
        pos = 0
        x_ref = refs[pos]; pos += 1
        s_ref = None
        if has_s:
            s_ref = refs[pos]; pos += 1
        w_refs, sh_refs = [], []
        for _ in range(n_stages):
            w_refs.append(refs[pos]); pos += 1
            sh_refs.append(refs[pos]); pos += 1
        o_ref = refs[pos]; pos += 1
        act_ref = refs[pos] if pos < len(refs) else None

        cur = x_ref[...]                                  # (rows_p, cin_p) bf16
        for si, (k, cinp, coutp, rinp, routp) in enumerate(stage_meta):
            if k == 1:
                acc = jnp.dot(cur, w_refs[si][...],
                              preferred_element_type=jnp.float32)
            else:
                acc = jnp.zeros((routp, coutp), jnp.float32)
                for t in range(k * k):
                    # S is 0/1 and cur is bf16 -> the product holds exact bf16
                    # values, so the cast back to bf16 is lossless.
                    shifted = jnp.dot(s_ref[t], cur,
                                      preferred_element_type=jnp.float32)
                    acc = acc + jnp.dot(shifted.astype(jnp.bfloat16),
                                        w_refs[si][t],
                                        preferred_element_type=jnp.float32)
            y = acc + sh_refs[si][...]                    # folded BatchNorm shift
            y = jnp.where(y > 0.0, y, 0.1 * y)            # LeakyReLU(0.1)
            if si == n_stages - 1:
                o_ref[...] = y
            else:
                act_ref[:, :coutp] = y.astype(jnp.bfloat16)
                cur = act_ref[:, :coutp]

    return kernel


def fused_conv_stack(x_nhwc, stack):
    """Run a Sequential of CnnBlocks (list of (params, k, stride, pad)) as ONE
    grid-less pallas_call. NHWC in / NHWC out, float32."""
    B, H, W, C0 = x_nhwc.shape
    n = len(stack)

    # Per-stage geometry: (k, s, p, Hin, Win, Hout, Wout, Cin, Cout)
    geoms = []
    h, w, c = H, W, C0
    for prm, k, s, p in stack:
        cout = prm["W"].shape[0]
        ho = (h + 2 * p - k) // s + 1
        wo = (w + 2 * p - k) // s + 1
        geoms.append((k, s, p, h, w, ho, wo, c, cout))
        h, w, c = ho, wo, cout

    rows_in = [B * g[3] * g[4] for g in geoms]
    rows_out = [B * g[5] * g[6] for g in geoms]
    rows_in_p = [_ru(r, 128) for r in rows_in]
    rows_out_p = [_ru(r, 128) for r in rows_out]
    if n > 1:  # multi-stage stacks are stride-1 -> constant row count
        assert all(ri == rows_in[0] and ro == rows_in[0]
                   for ri, ro in zip(rows_in, rows_out))

    # Stack input -> padded bf16 (Mp, C0p)
    M0, M0p, C0p = rows_in[0], rows_in_p[0], _ru(C0, 128)
    x_flat = x_nhwc.reshape(M0, C0).astype(jnp.float32)
    x_flat = jnp.pad(x_flat, ((0, M0p - M0), (0, C0p - C0))).astype(jnp.bfloat16)
    inputs = [x_flat]

    # One shared tap-gather bank per stack (all 3x3 stages share geometry here).
    s_cfg = None
    for gi, g in enumerate(geoms):
        if g[0] > 1:
            cfg = (g[0], g[1], g[2], g[3], g[4], rows_in_p[gi], rows_out_p[gi])
            assert s_cfg is None or cfg == s_cfg, "one 3x3 geometry per fused stack"
            s_cfg = cfg
    has_s = s_cfg is not None
    if has_s:
        k_, s_, p_, h_, w_, mip, mop = s_cfg
        inputs.append(_build_shift_mats(B, h_, w_, k_, s_, p_, mip, mop))

    # Per-stage weights (BN scale folded in, bf16) and shifts (f32).
    stage_meta = []
    eps = 1e-5
    for gi, (prm, k, s, p) in enumerate(stack):
        cin, cout = geoms[gi][7], geoms[gi][8]
        cinp, coutp = _ru(cin, 128), _ru(cout, 128)
        scale = prm["gamma"] / jnp.sqrt(prm["var"] + eps)
        shift = (prm["b"] - prm["mean"]) * scale + prm["beta"]
        Wt = prm["W"].astype(jnp.float32)
        if k == 1:
            wm = Wt.reshape(cout, cin).T * scale[None, :]                # (cin, cout)
            wm = jnp.pad(wm, ((0, cinp - cin), (0, coutp - cout)))
        else:
            wm = jnp.transpose(Wt, (2, 3, 1, 0)).reshape(k * k, cin, cout)
            wm = wm * scale[None, None, :]
            wm = jnp.pad(wm, ((0, 0), (0, cinp - cin), (0, coutp - cout)))
        sh = jnp.pad(shift.reshape(1, cout).astype(jnp.float32),
                     ((0, 0), (0, coutp - cout)))
        inputs.append(wm.astype(jnp.bfloat16))
        inputs.append(sh)
        stage_meta.append((k, cinp, coutp, rows_in_p[gi], rows_out_p[gi]))

    out_rows_p = rows_out_p[-1]
    out_cols_p = stage_meta[-1][2]
    cmax_p = max(max(m[1], m[2]) for m in stage_meta)

    scratch = []
    if n > 1:
        scratch.append(pltpu.VMEM((rows_in_p[0], cmax_p), jnp.bfloat16))

    kernel = _make_stack_kernel(tuple(stage_meta), has_s)
    # Grid-less call: every operand is mapped whole into VMEM (single-buffered).
    out = pl.pallas_call(
        kernel,
        out_shape=jax.ShapeDtypeStruct((out_rows_p, out_cols_p), jnp.float32),
        scratch_shapes=scratch,
        compiler_params=pltpu.CompilerParams(vmem_limit_bytes=_VMEM_LIMIT),
    )(*inputs)

    Mlast = rows_out[-1]
    Ho, Wo, Cout = geoms[-1][5], geoms[-1][6], geoms[-1][8]
    return out[:Mlast, :Cout].reshape(B, Ho, Wo, Cout)


def upsample2x(x_nhwc):
    # nn.Upsample(scale_factor=2), default mode='nearest'
    return jnp.repeat(jnp.repeat(x_nhwc, 2, axis=1), 2, axis=2)


# ----------------------------------------------------------------------------
# Deterministic parameter initialization (matches module __init__ shapes)
# ----------------------------------------------------------------------------
def init_cnn_block(key, cin, cout, k):
    ks = jax.random.split(key, 6)
    fan_in = cin * k * k
    W = jax.random.normal(ks[0], (cout, cin, k, k), jnp.float32) / jnp.sqrt(float(fan_in))
    b = 0.01 * jax.random.normal(ks[1], (cout,), jnp.float32)
    gamma = 1.0 + 0.1 * jax.random.normal(ks[2], (cout,), jnp.float32)
    beta = 0.1 * jax.random.normal(ks[3], (cout,), jnp.float32)
    mean = 0.1 * jax.random.normal(ks[4], (cout,), jnp.float32)
    var = jnp.abs(1.0 + 0.1 * jax.random.normal(ks[5], (cout,), jnp.float32))
    return dict(W=W, b=b, gamma=gamma, beta=beta, mean=mean, var=var)


def init_pan_params(key):
    keys = iter(jax.random.split(key, 64))

    def blk(cin, cout, k=1, s=1, p=0):
        return (init_cnn_block(next(keys), cin, cout, k), k, s, p)

    P = {}
    P["ft3"] = [blk(64, 128, 1)]
    P["ft4"] = [blk(160, 256, 1)]
    P["res5_4"] = [blk(512, 256, 1)]          # Upsample: 1x1 conv then nearest x2
    P["res4_3"] = [blk(256, 128, 1)]
    P["res3_4"] = [blk(128, 256, 3, 2, 1)]    # Downsample: 3x3 stride-2 conv
    P["res4_5"] = [blk(256, 512, 3, 2, 1)]
    P["ds5"] = [blk(2048, 512, 1), blk(512, 1024, 3, 1, 1), blk(1024, 512, 1)]
    P["ds4"] = [blk(512, 256, 1), blk(256, 512, 3, 1, 1), blk(512, 256, 1),
                blk(256, 512, 3, 1, 1), blk(512, 256, 1)]
    P["ds3"] = [blk(256, 128, 1), blk(128, 256, 3, 1, 1), blk(256, 128, 1),
                blk(128, 256, 3, 1, 1), blk(256, 128, 1)]
    P["us4"] = [blk(512, 256, 1), blk(256, 512, 3, 1, 1), blk(512, 256, 1),
                blk(256, 512, 3, 1, 1), blk(512, 256, 1)]
    P["us5"] = [blk(1024, 512, 1), blk(512, 1024, 3, 1, 1), blk(1024, 512, 1),
                blk(512, 1024, 3, 1, 1), blk(1024, 512, 1)]
    return P


# ----------------------------------------------------------------------------
# PathAggregationNet forward (NCHW in / NCHW out, like PyTorch)
# ----------------------------------------------------------------------------
def path_aggregation_net(P, scale1, scale2, scale3):
    to_nhwc = lambda t: jnp.transpose(t, (0, 2, 3, 1))
    to_nchw = lambda t: jnp.transpose(t, (0, 3, 1, 2))
    s1, s2, s3 = to_nhwc(scale1), to_nhwc(scale2), to_nhwc(scale3)

    x1 = fused_conv_stack(s1, P["ft3"])                    # (B, 16, 16, 128)
    x2 = fused_conv_stack(s2, P["ft4"])                    # (B,  8,  8, 256)
    x3 = s3                                                # (B,  4,  4, 2048)

    d5 = fused_conv_stack(x3, P["ds5"])                    # (B, 4, 4, 512)
    r1 = jnp.concatenate(
        [x2, upsample2x(fused_conv_stack(d5, P["res5_4"]))], axis=-1)   # 256+256
    d4 = fused_conv_stack(r1, P["ds4"])                    # (B, 8, 8, 256)
    r2 = jnp.concatenate(
        [x1, upsample2x(fused_conv_stack(d4, P["res4_3"]))], axis=-1)   # 128+128
    d3 = fused_conv_stack(r2, P["ds3"])                    # (B, 16, 16, 128)
    r3 = jnp.concatenate(
        [fused_conv_stack(d3, P["res3_4"]), d4], axis=-1)  # 256+256
    u4 = fused_conv_stack(r3, P["us4"])                    # (B, 8, 8, 256)
    r4 = jnp.concatenate(
        [fused_conv_stack(u4, P["res4_5"]), d5], axis=-1)  # 512+512
    u5 = fused_conv_stack(r4, P["us5"])                    # (B, 4, 4, 512)

    return to_nchw(d3), to_nchw(u4), to_nchw(u5)


if __name__ == "__main__":
    master = jax.random.PRNGKey(0)
    k_in, k_par = jax.random.split(master)
    k1, k2, k3 = jax.random.split(k_in, 3)

    # Small shapes consistent with the module's channel contract:
    # scale1: 64ch @ 16x16, scale2: 160ch @ 8x8, scale3: 2048ch @ 4x4
    scale1 = jax.random.normal(k1, (2, 64, 16, 16), jnp.float32)
    scale2 = jax.random.normal(k2, (2, 160, 8, 8), jnp.float32)
    scale3 = jax.random.normal(k3, (2, 2048, 4, 4), jnp.float32)

    params = init_pan_params(k_par)
    d3, u4, u5 = path_aggregation_net(params, scale1, scale2, scale3)
    jax.block_until_ready((d3, u4, u5))

    assert d3.shape == (2, 128, 16, 16), d3.shape
    assert u4.shape == (2, 256, 8, 8), u4.shape
    assert u5.shape == (2, 512, 4, 4), u5.shape
    assert bool(jnp.all(jnp.isfinite(d3))) and bool(jnp.all(jnp.isfinite(u4))) \
        and bool(jnp.all(jnp.isfinite(u5)))
    print("KERNEL_OK")
</pallas_src>

<mosaic_0001>
module attributes {stable_mosaic.version = 11 : i64} {
  func.func @kernel(%arg0: memref<512x128xbf16, #tpu.memory_space<vmem>>, %arg1: memref<128x128xbf16, #tpu.memory_space<vmem>>, %arg2: memref<1x128xf32, #tpu.memory_space<vmem>>, %arg3: memref<512x128xf32, #tpu.memory_space<vmem>>) attributes {dimension_semantics = [], scalar_prefetch = 0 : i64, scratch_operands = 0 : i64, tpu.core_type = #tpu.core_type<tc>} {
    %c0 = arith.constant 0 : index
    %c0_0 = arith.constant 0 : index
    %0 = vector.load %arg0[%c0, %c0_0] : memref<512x128xbf16, #tpu.memory_space<vmem>>, vector<512x128xbf16>
    %c0_1 = arith.constant 0 : index
    %c0_2 = arith.constant 0 : index
    %1 = vector.load %arg1[%c0_1, %c0_2] : memref<128x128xbf16, #tpu.memory_space<vmem>>, vector<128x128xbf16>
    %cst = arith.constant dense<0.000000e+00> : vector<512x128xf32>
    %2 = tpu.matmul %0, %1, %cst {dimension_numbers = #tpu.dot_dimension_numbers<[1], [0], [0], [1], [0, 0, 1, 1], [], []>} : vector<512x128xbf16>, vector<128x128xbf16>, vector<512x128xf32> -> vector<512x128xf32>
    %c0_3 = arith.constant 0 : index
    %c0_4 = arith.constant 0 : index
    %3 = vector.load %arg2[%c0_3, %c0_4] : memref<1x128xf32, #tpu.memory_space<vmem>>, vector<1x128xf32>
    %4 = vector.broadcast %3 : vector<1x128xf32> to vector<512x128xf32>
    %5 = arith.addf %2, %4 : vector<512x128xf32>
    %cst_5 = arith.constant 0.000000e+00 : f32
    %6 = vector.broadcast %cst_5 : f32 to vector<512x128xf32>
    %7 = arith.cmpf ogt, %5, %6 : vector<512x128xf32>
    %cst_6 = arith.constant 1.000000e-01 : f32
    %8 = vector.broadcast %cst_6 : f32 to vector<512x128xf32>
    %9 = arith.mulf %8, %5 : vector<512x128xf32>
    %10 = arith.select %7, %5, %9 : vector<512x128xi1>, vector<512x128xf32>
    %c0_7 = arith.constant 0 : index
    %c0_8 = arith.constant 0 : index
    %11 = vector.load %arg3[%c0_7, %c0_8] : memref<512x128xf32, #tpu.memory_space<vmem>>, vector<512x128xf32>
    tpu.vector_store %arg3[%c0_7, %c0_8], %10 {strides = array<i32>} : memref<512x128xf32, #tpu.memory_space<vmem>>, vector<512x128xf32>,
    return
  }
}

</mosaic_0001>

<llo_original>
// kernel: tpu_custom_call.1
$region0: #{tpu_custom_call.1}
  #allocation0 [shape = 'u32[]', space=smem, size = 0x4, offset = 0x4, fixed_abs, tag = 'smem constant byte address 0x4 - core index']
  #allocation1 [shape = 'u32[144,128]{1,0:T(1,128)}', space=vmem, size = 0x12000, scoped, tag = 'internal scratch']
  %s0 = inlined_call_operand.hbm [shape: bf16[512,128], index: 0, kind: input, shape index: {}]
  %s1 = inlined_call_operand.hbm [shape: bf16[128,128], index: 1, kind: input, shape index: {}]
  %s2 = inlined_call_operand.vmem [shape: f32[1,128], index: 2, kind: input, shape index: {}]
  %s3 = inlined_call_operand.hbm [shape: f32[512,128], index: 3, kind: output, shape index: {}]
  %s4 = sld [smem:[#allocation0]]
  $region30: #{tpu_custom_call.1} parent=0
    _
  %s6 = ssub.s32 1, %s4
  %s7 = scalar_select 0, %s6, %s4
  $region1: #{tpu_custom_call.1} parent=0
    #allocation2 [shape = 'u8[131072]{0}', space=vmem, size = 0x20000, scoped, tag = 'input window, operand 0, single buffered']
    #allocation3 [shape = 's32[1]{0}', space=sflag, size = 0x4, scoped, tag = 'scoped memory for tpu_custom_call.1']
    #allocation4 [shape = 's32[1]{0}', space=sflag, size = 0x4, scoped, tag = 'scoped memory for tpu_custom_call.1']
    #allocation5 [shape = 'u8[32768]{0}', space=vmem, size = 0x8000, scoped, tag = 'input window, operand 1, single buffered']
    #allocation6 [shape = 's32[1]{0}', space=sflag, size = 0x4, scoped, tag = 'scoped memory for tpu_custom_call.1']
    #allocation7 [shape = 'u8[262144]{0}', space=vmem, size = 0x40000, scoped, tag = 'output window, operand 0, single buffered']
    %8 = vsyncpa [#allocation3], 0
    %9 = vsyncpa [#allocation6], 0
    %10 = vsyncpa [#allocation4], 0
    // Predicated region
    $region2: #{tpu_custom_call.1} parent=1 // pred_check
      _
    $region3: #{tpu_custom_call.1} parent=1 // pred_check_branch
      %12 = sbr.rel (0) target = $region5
    $region4: #{tpu_custom_call.1} parent=1 // pred_region
      %s14 = ssub.s32 4096, 4096
      %15 = vsyncadd [#allocation3], %s14
      %s16 = sshll.u32 [#allocation2], 4
      %s17 = int_to_ptr.vmem [resolvable:$true] %s16
      %22 = dma.hbm_to_vmem [thread:$0]  %s0, 4096, %s17, [#allocation3], 64, 64, 4
    $region5: #{tpu_custom_call.1} parent=1 // pred_fallthru
      _
    // Predicated region
    $region6: #{tpu_custom_call.1} parent=1 // pred_check
      _
    $region7: #{tpu_custom_call.1} parent=1 // pred_check_branch
      %24 = sbr.rel (0) target = $region9
    $region8: #{tpu_custom_call.1} parent=1 // pred_region
      %s26 = ssub.s32 1024, 1024
      %27 = vsyncadd [#allocation6], %s26
      %s28 = sshll.u32 [#allocation5], 4
      %s29 = int_to_ptr.vmem [resolvable:$true] %s28
      %34 = dma.hbm_to_vmem [thread:$0]  %s1, 1024, %s29, [#allocation6], 64, 64, 4
    $region9: #{tpu_custom_call.1} parent=1 // pred_fallthru
      _
    // Predicated region
    $region10: #{tpu_custom_call.1} parent=1 // pred_check
      _
    $region11: #{tpu_custom_call.1} parent=1 // pred_check_branch
      %36 = sbr.rel (0) target = $region13
    $region12: #{tpu_custom_call.1} parent=1 // pred_region
      _
    $region13: #{tpu_custom_call.1} parent=1 // pred_fallthru
      _
    // Predicated region
    $region14: #{tpu_custom_call.1} parent=1 // pred_check
      _
    $region15: #{tpu_custom_call.1} parent=1 // pred_check_branch
      %38 = sbr.rel (0) target = $region17
    $region16: #{tpu_custom_call.1} parent=1 // pred_region
      %39 = dma.done [#allocation3], 4096
    $region17: #{tpu_custom_call.1} parent=1 // pred_fallthru
      _
    // Predicated region
    $region18: #{tpu_custom_call.1} parent=1 // pred_check
      _
    $region19: #{tpu_custom_call.1} parent=1 // pred_check_branch
      %41 = sbr.rel (0) target = $region21
    $region20: #{tpu_custom_call.1} parent=1 // pred_region
      %42 = dma.done [#allocation6], 1024
    $region21: #{tpu_custom_call.1} parent=1 // pred_fallthru
      _
    %v44 = vld [vmem:[#allocation2] sm:$0xf]
    %v45 = vld [vmem:[#allocation2 + $0x4] sm:$0xf]
    %v46 = vld [vmem:[#allocation2 + $0x8] sm:$0xf]
    %v47 = vld [vmem:[#allocation2 + $0xc] sm:$0xf]
    %v48 = vld [vmem:[#allocation2 + $0x10] sm:$0xf]
    %v49 = vld [vmem:[#allocation2 + $0x14] sm:$0xf]
    %v50 = vld [vmem:[#allocation2 + $0x18] sm:$0xf]
    %v51 = vld [vmem:[#allocation2 + $0x1c] sm:$0xf]
    %v52 = vld [vmem:[#allocation2 + $0x20] sm:$0xf]
    %v53 = vld [vmem:[#allocation2 + $0x24] sm:$0xf]
    %v54 = vld [vmem:[#allocation2 + $0x28] sm:$0xf]
    %v55 = vld [vmem:[#allocation2 + $0x2c] sm:$0xf]
    %v56 = vld [vmem:[#allocation2 + $0x30] sm:$0xf]
    %v57 = vld [vmem:[#allocation2 + $0x34] sm:$0xf]
    %v58 = vld [vmem:[#allocation2 + $0x38] sm:$0xf]
    %v59 = vld [vmem:[#allocation2 + $0x3c] sm:$0xf]
    %v60 = vld [vmem:[#allocation2 + $0x40] sm:$0xf]
    %v61 = vld [vmem:[#allocation2 + $0x44] sm:$0xf]
    %v62 = vld [vmem:[#allocation2 + $0x48] sm:$0xf]
    %v63 = vld [vmem:[#allocation2 + $0x4c] sm:$0xf]
    %v64 = vld [vmem:[#allocation2 + $0x50] sm:$0xf]
    %v65 = vld [vmem:[#allocation2 + $0x54] sm:$0xf]
    %v66 = vld [vmem:[#allocation2 + $0x58] sm:$0xf]
    %v67 = vld [vmem:[#allocation2 + $0x5c] sm:$0xf]
    %v68 = vld [vmem:[#allocation2 + $0x60] sm:$0xf]
    %v69 = vld [vmem:[#allocation2 + $0x64] sm:$0xf]
    %v70 = vld [vmem:[#allocation2 + $0x68] sm:$0xf]
    %v71 = vld [vmem:[#allocation2 + $0x6c] sm:$0xf]
    %v72 = vld [vmem:[#allocation2 + $0x70] sm:$0xf]
    %v73 = vld [vmem:[#allocation2 + $0x74] sm:$0xf]
    %v74 = vld [vmem:[#allocation2 + $0x78] sm:$0xf]
    %v75 = vld [vmem:[#allocation2 + $0x7c] sm:$0xf]
    %v76 = vld [vmem:[#allocation2 + $0x80] sm:$0xf]
    %v77 = vld [vmem:[#allocation2 + $0x84] sm:$0xf]
    %v78 = vld [vmem:[#allocation2 + $0x88] sm:$0xf]
    %v79 = vld [vmem:[#allocation2 + $0x8c] sm:$0xf]
    %v80 = vld [vmem:[#allocation2 + $0x90] sm:$0xf]
    %v81 = vld [vmem:[#allocation2 + $0x94] sm:$0xf]
    %v82 = vld [vmem:[#allocation2 + $0x98] sm:$0xf]
    %v83 = vld [vmem:[#allocation2 + $0x9c] sm:$0xf]
    %v84 = vld [vmem:[#allocation2 + $0xa0] sm:$0xf]
    %v85 = vld [vmem:[#allocation2 + $0xa4] sm:$0xf]
    %v86 = vld [vmem:[#allocation2 + $0xa8] sm:$0xf]
    %v87 = vld [vmem:[#allocation2 + $0xac] sm:$0xf]
    %v88 = vld [vmem:[#allocation2 + $0xb0] sm:$0xf]
    %v89 = vld [vmem:[#allocation2 + $0xb4] sm:$0xf]
    %v90 = vld [vmem:[#allocation2 + $0xb8] sm:$0xf]
    %v91 = vld [vmem:[#allocation2 + $0xbc] sm:$0xf]
    %v92 = vld [vmem:[#allocation2 + $0xc0] sm:$0xf]
    %v93 = vld [vmem:[#allocation2 + $0xc4] sm:$0xf]
    %v94 = vld [vmem:[#allocation2 + $0xc8] sm:$0xf]
    %v95 = vld [vmem:[#allocation2 + $0xcc] sm:$0xf]
    %v96 = vld [vmem:[#allocation2 + $0xd0] sm:$0xf]
    %v97 = vld [vmem:[#allocation2 + $0xd4] sm:$0xf]
    %v98 = vld [vmem:[#allocation2 + $0xd8] sm:$0xf]
    %v99 = vld [vmem:[#allocation2 + $0xdc] sm:$0xf]
    %v100 = vld [vmem:[#allocation2 + $0xe0] sm:$0xf]
    %v101 = vld [vmem:[#allocation2 + $0xe4] sm:$0xf]
    %v102 = vld [vmem:[#allocation2 + $0xe8] sm:$0xf]
    %v103 = vld [vmem:[#allocation2 + $0xec] sm:$0xf]
    %v104 = vld [vmem:[#allocation2 + $0xf0] sm:$0xf]
    %v105 = vld [vmem:[#allocation2 + $0xf4] sm:$0xf]
    %v106 = vld [vmem:[#allocation2 + $0xf8] sm:$0xf]
    %v107 = vld [vmem:[#allocation2 + $0xfc] sm:$0xf]
    %v108 = vld [vmem:[#allocation5] sm:$0xf]
    %v109 = vld [vmem:[#allocation5 + $0x4] sm:$0xf]
    %v110 = vld [vmem:[#allocation5 + $0x8] sm:$0xf]
    %v111 = vld [vmem:[#allocation5 + $0xc] sm:$0xf]
    %v112 = vld [vmem:[#allocation5 + $0x10] sm:$0xf]
    %v113 = vld [vmem:[#allocation5 + $0x14] sm:$0xf]
    %v114 = vld [vmem:[#allocation5 + $0x18] sm:$0xf]
    %v115 = vld [vmem:[#allocation5 + $0x1c] sm:$0xf]
    %v116 = vld [vmem:[#allocation5 + $0x20] sm:$0xf]
    %v117 = vld [vmem:[#allocation5 + $0x24] sm:$0xf]
    %v118 = vld [vmem:[#allocation5 + $0x28] sm:$0xf]
    %v119 = vld [vmem:[#allocation5 + $0x2c] sm:$0xf]
    %v120 = vld [vmem:[#allocation5 + $0x30] sm:$0xf]
    %v121 = vld [vmem:[#allocation5 + $0x34] sm:$0xf]
    %v122 = vld [vmem:[#allocation5 + $0x38] sm:$0xf]
    %v123 = vld [vmem:[#allocation5 + $0x3c] sm:$0xf]
    %v124 = vld [vmem:[%s2] sm:$0x1]
    %v126 = vlaneseq
    %v127 = vshrl.u32 %v126, 7
    %v128 = vsub.s32 0, %v127
    %v129 = vrot.slane %v124, %v128
    %v195 = vunpack.c.l.b16 %v44
    %v196 = vunpack.c.l.b16 %v45
    %v197 = vunpack.c.l.b16 %v46
    %v198 = vunpack.c.l.b16 %v47
    %v199 = vunpack.c.l.b16 %v48
    %v200 = vunpack.c.l.b16 %v49
    %v201 = vunpack.c.l.b16 %v50
    %v202 = vunpack.c.l.b16 %v51
    %v203 = vunpack.c.l.b16 %v52
    %v204 = vunpack.c.l.b16 %v53
    %v205 = vunpack.c.l.b16 %v54
    %v206 = vunpack.c.l.b16 %v55
    %v207 = vunpack.c.l.b16 %v56
    %v208 = vunpack.c.l.b16 %v57
    %v209 = vunpack.c.l.b16 %v58
    %v210 = vunpack.c.l.b16 %v59
    %v211 = vunpack.c.l.b16 %v60
    %v212 = vunpack.c.l.b16 %v61
    %v213 = vunpack.c.l.b16 %v62
    %v214 = vunpack.c.l.b16 %v63
    %v215 = vunpack.c.l.b16 %v64
    %v216 = vunpack.c.l.b16 %v65
    %v217 = vunpack.c.l.b16 %v66
    %v218 = vunpack.c.l.b16 %v67
    %v219 = vunpack.c.l.b16 %v68
    %v220 = vunpack.c.l.b16 %v69
    %v221 = vunpack.c.l.b16 %v70
    %v222 = vunpack.c.l.b16 %v71
    %v223 = vunpack.c.l.b16 %v72
    %v224 = vunpack.c.l.b16 %v73
    %v225 = vunpack.c.l.b16 %v74
    %v226 = vunpack.c.l.b16 %v75
    %v227 = vunpack.c.l.b16 %v76
    %v228 = vunpack.c.l.b16 %v77
    %v229 = vunpack.c.l.b16 %v78
    %v230 = vunpack.c.l.b16 %v79
    %v231 = vunpack.c.l.b16 %v80
    %v232 = vunpack.c.l.b16 %v81
    %v233 = vunpack.c.l.b16 %v82
    %v234 = vunpack.c.l.b16 %v83
    %v235 = vunpack.c.l.b16 %v84
    %v236 = vunpack.c.l.b16 %v85
    %v237 = vunpack.c.l.b16 %v86
    %v238 = vunpack.c.l.b16 %v87
    %v239 = vunpack.c.l.b16 %v88
    %v240 = vunpack.c.l.b16 %v89
    %v241 = vunpack.c.l.b16 %v90
    %v242 = vunpack.c.l.b16 %v91
    %v243 = vunpack.c.l.b16 %v92
    %v244 = vunpack.c.l.b16 %v93
    %v245 = vunpack.c.l.b16 %v94
    %v246 = vunpack.c.l.b16 %v95
    %v247 = vunpack.c.l.b16 %v96
    %v248 = vunpack.c.l.b16 %v97
    %v249 = vunpack.c.l.b16 %v98
    %v250 = vunpack.c.l.b16 %v99
    %v251 = vunpack.c.l.b16 %v100
    %v252 = vunpack.c.l.b16 %v101
    %v253 = vunpack.c.l.b16 %v102
    %v254 = vunpack.c.l.b16 %v103
    %v255 = vunpack.c.l.b16 %v104
    %v256 = vunpack.c.l.b16 %v105
    %v257 = vunpack.c.l.b16 %v106
    %v258 = vunpack.c.l.b16 %v107
    %v259 = vpack.c.b16 %v196, %v195
    %v260 = vpack.c.b16 %v198, %v197
    %v261 = vpack.c.b16 %v200, %v199
    %v262 = vpack.c.b16 %v202, %v201
    %v263 = vpack.c.b16 %v204, %v203
    %v264 = vpack.c.b16 %v206, %v205
    %v265 = vpack.c.b16 %v208, %v207
    %v266 = vpack.c.b16 %v210, %v209
    %v267 = vpack.c.b16 %v212, %v211
    %v268 = vpack.c.b16 %v214, %v213
    %v269 = vpack.c.b16 %v216, %v215
    %v270 = vpack.c.b16 %v218, %v217
    %v271 = vpack.c.b16 %v220, %v219
    %v272 = vpack.c.b16 %v222, %v221
    %v273 = vpack.c.b16 %v224, %v223
    %v274 = vpack.c.b16 %v226, %v225
    %v275 = vpack.c.b16 %v228, %v227
    %v276 = vpack.c.b16 %v230, %v229
    %v277 = vpack.c.b16 %v232, %v231
    %v278 = vpack.c.b16 %v234, %v233
    %v279 = vpack.c.b16 %v236, %v235
    %v280 = vpack.c.b16 %v238, %v237
    %v281 = vpack.c.b16 %v240, %v239
    %v282 = vpack.c.b16 %v242, %v241
    %v283 = vpack.c.b16 %v244, %v243
    %v284 = vpack.c.b16 %v246, %v245
    %v285 = vpack.c.b16 %v248, %v247
    %v286 = vpack.c.b16 %v250, %v249
    %v287 = vpack.c.b16 %v252, %v251
    %v288 = vpack.c.b16 %v254, %v253
    %v289 = vpack.c.b16 %v256, %v255
    %v290 = vpack.c.b16 %v258, %v257
    %v339 = vunpack.c.l.b16 %v108
    %v340 = vunpack.c.l.b16 %v109
    %v341 = vunpack.c.l.b16 %v110
    %v342 = vunpack.c.l.b16 %v111
    %v343 = vunpack.c.l.b16 %v112
    %v344 = vunpack.c.l.b16 %v113
    %v345 = vunpack.c.l.b16 %v114
    %v346 = vunpack.c.l.b16 %v115
    %v347 = vunpack.c.l.b16 %v116
    %v348 = vunpack.c.l.b16 %v117
    %v349 = vunpack.c.l.b16 %v118
    %v350 = vunpack.c.l.b16 %v119
    %v351 = vunpack.c.l.b16 %v120
    %v352 = vunpack.c.l.b16 %v121
    %v353 = vunpack.c.l.b16 %v122
    %v354 = vunpack.c.l.b16 %v123
    %v355 = vpack.c.b16 %v340, %v339
    %v356 = vpack.c.b16 %v342, %v341
    %v357 = vpack.c.b16 %v344, %v343
    %v358 = vpack.c.b16 %v346, %v345
    %v359 = vpack.c.b16 %v348, %v347
    %v360 = vpack.c.b16 %v350, %v349
    %v361 = vpack.c.b16 %v352, %v351
    %v362 = vpack.c.b16 %v354, %v353
    %371 = vmatprep.subr.bf16.mxu0 0
    %372 = vmatpush1.bf16.msra.mxu0 %v362
    %373 = vmatprep.subr.bf16.mxu0 0
    %374 = vmatpush1.bf16.msra.mxu0 %v361
    %375 = vmatprep.subr.bf16.mxu0 0
    %376 = vmatpush1.bf16.msra.mxu0 %v360
    %377 = vmatprep.subr.bf16.mxu0 0
    %378 = vmatpush1.bf16.msra.mxu0 %v359
    %379 = vmatprep.subr.bf16.mxu0 0
    %380 = vmatpush1.bf16.msra.mxu0 %v358
    %381 = vmatprep.subr.bf16.mxu0 0
    %382 = vmatpush1.bf16.msra.mxu0 %v357
    %383 = vmatprep.subr.bf16.mxu0 0
    %384 = vmatpush1.bf16.msra.mxu0 %v356
    %385 = vmatprep.subr.bf16.mxu0 0
    %386 = vmatpush1.bf16.msra.mxu0 %v355
    %387 = vmatprep.subr.bf16.mxu0 0
    %388 = vmatpush2.bf16.msra.mxu0 0
    %389 = vmatprep.subr.bf16.mxu0 0
    %390 = vmatpush2.bf16.msra.mxu0 0
    %391 = vmatprep.subr.bf16.mxu0 0
    %392 = vmatpush2.bf16.msra.mxu0 0
    %393 = vmatprep.subr.bf16.mxu0 0
    %394 = vmatpush2.bf16.msra.mxu0 0
    %395 = vmatprep.subr.bf16.mxu0 0
    %396 = vmatpush2.bf16.msra.mxu0 0
    %397 = vmatprep.subr.bf16.mxu0 0
    %398 = vmatpush2.bf16.msra.mxu0 0
    %399 = vmatprep.subr.bf16.mxu0 0
    %400 = vmatpush2.bf16.msra.mxu0 0
    %401 = vmatprep.subr.bf16.mxu0 0
    %402 = vmatpush2.bf16.msra.mxu0 0
    %403 = vmatprep.mubr.bf16.mxu0 0
    %404 = vmatmul.mubr.bf16.gmra.mxu0 %v259
    %v405 = vpop.f32.mrf.mxu0
    %v406 = vadd.f32 %v129, %v405
    %v407 = vpop.f32.mrf.mxu0
    %v408 = vpop.f32.mrf.mxu0
    %v409 = vadd.f32 %v129, %v408
    %v410 = vpop.f32.mrf.mxu0
    %411 = vmatprep.mubr.bf16.mxu0 0
    %412 = vmatmul.mubr.bf16.gmra.mxu0 %v260
    %v413 = vpop.f32.mrf.mxu0
    %v414 = vadd.f32 %v129, %v413
    %v415 = vpop.f32.mrf.mxu0
    %v416 = vpop.f32.mrf.mxu0
    %v417 = vadd.f32 %v129, %v416
    %v418 = vpop.f32.mrf.mxu0
    %419 = vmatprep.mubr.bf16.mxu0 0
    %420 = vmatmul.mubr.bf16.gmra.mxu0 %v261
    %v421 = vpop.f32.mrf.mxu0
    %v422 = vadd.f32 %v129, %v421
    %v423 = vpop.f32.mrf.mxu0
    %v424 = vpop.f32.mrf.mxu0
    %v425 = vadd.f32 %v129, %v424
    %v426 = vpop.f32.mrf.mxu0
    %427 = vmatprep.mubr.bf16.mxu0 0
    %428 = vmatmul.mubr.bf16.gmra.mxu0 %v262
    %v429 = vpop.f32.mrf.mxu0
    %v430 = vadd.f32 %v129, %v429
    %v431 = vpop.f32.mrf.mxu0
    %v432 = vpop.f32.mrf.mxu0
    %v433 = vadd.f32 %v129, %v432
    %v434 = vpop.f32.mrf.mxu0
    %435 = vmatprep.mubr.bf16.mxu0 0
    %436 = vmatmul.mubr.bf16.gmra.mxu0 %v263
    %v437 = vpop.f32.mrf.mxu0
    %v438 = vadd.f32 %v129, %v437
    %v439 = vpop.f32.mrf.mxu0
    %v440 = vpop.f32.mrf.mxu0
    %v441 = vadd.f32 %v129, %v440
    %v442 = vpop.f32.mrf.mxu0
    %443 = vmatprep.mubr.bf16.mxu0 0
    %444 = vmatmul.mubr.bf16.gmra.mxu0 %v264
    %v445 = vpop.f32.mrf.mxu0
    %v446 = vadd.f32 %v129, %v445
    %v447 = vpop.f32.mrf.mxu0
    %v448 = vpop.f32.mrf.mxu0
    %v449 = vadd.f32 %v129, %v448
    %v450 = vpop.f32.mrf.mxu0
    %451 = vmatprep.mubr.bf16.mxu0 0
    %452 = vmatmul.mubr.bf16.gmra.mxu0 %v265
    %v453 = vpop.f32.mrf.mxu0
    %v454 = vadd.f32 %v129, %v453
    %v455 = vpop.f32.mrf.mxu0
    %v456 = vpop.f32.mrf.mxu0
    %v457 = vadd.f32 %v129, %v456
    %v458 = vpop.f32.mrf.mxu0
    %459 = vmatprep.mubr.bf16.mxu0 0
    %460 = vmatmul.mubr.bf16.gmra.mxu0 %v266
    %v461 = vpop.f32.mrf.mxu0
    %v462 = vadd.f32 %v129, %v461
    %v463 = vpop.f32.mrf.mxu0
    %v464 = vpop.f32.mrf.mxu0
    %v465 = vadd.f32 %v129, %v464
    %v466 = vpop.f32.mrf.mxu0
    %467 = vmatprep.mubr.bf16.mxu0 0
    %468 = vmatmul.mubr.bf16.gmra.mxu0 %v267
    %v469 = vpop.f32.mrf.mxu0
    %v470 = vadd.f32 %v129, %v469
    %v471 = vpop.f32.mrf.mxu0
    %v472 = vpop.f32.mrf.mxu0
    %v473 = vadd.f32 %v129, %v472
    %v474 = vpop.f32.mrf.mxu0
    %475 = vmatprep.mubr.bf16.mxu0 0
    %476 = vmatmul.mubr.bf16.gmra.mxu0 %v268
    %v477 = vpop.f32.mrf.mxu0
    %v478 = vadd.f32 %v129, %v477
    %v479 = vpop.f32.mrf.mxu0
    %v480 = vpop.f32.mrf.mxu0
    %v481 = vadd.f32 %v129, %v480
    %v482 = vpop.f32.mrf.mxu0
    %483 = vmatprep.mubr.bf16.mxu0 0
    %484 = vmatmul.mubr.bf16.gmra.mxu0 %v269
    %v485 = vpop.f32.mrf.mxu0
    %v486 = vadd.f32 %v129, %v485
    %v487 = vpop.f32.mrf.mxu0
    %v488 = vpop.f32.mrf.mxu0
    %v489 = vadd.f32 %v129, %v488
    %v490 = vpop.f32.mrf.mxu0
    %491 = vmatprep.mubr.bf16.mxu0 0
    %492 = vmatmul.mubr.bf16.gmra.mxu0 %v270
    %v493 = vpop.f32.mrf.mxu0
    %v494 = vadd.f32 %v129, %v493
    %v495 = vpop.f32.mrf.mxu0
    %v496 = vpop.f32.mrf.mxu0
    %v497 = vadd.f32 %v129, %v496
    %v498 = vpop.f32.mrf.mxu0
    %499 = vmatprep.mubr.bf16.mxu0 0
    %500 = vmatmul.mubr.bf16.gmra.mxu0 %v271
    %v501 = vpop.f32.mrf.mxu0
    %v502 = vadd.f32 %v129, %v501
    %v503 = vpop.f32.mrf.mxu0
    %v504 = vpop.f32.mrf.mxu0
    %v505 = vadd.f32 %v129, %v504
    %v506 = vpop.f32.mrf.mxu0
    %507 = vmatprep.mubr.bf16.mxu0 0
    %508 = vmatmul.mubr.bf16.gmra.mxu0 %v272
    %v509 = vpop.f32.mrf.mxu0
    %v510 = vadd.f32 %v129, %v509
    %v511 = vpop.f32.mrf.mxu0
    %v512 = vpop.f32.mrf.mxu0
    %v513 = vadd.f32 %v129, %v512
    %v514 = vpop.f32.mrf.mxu0
    %515 = vmatprep.mubr.bf16.mxu0 0
    %516 = vmatmul.mubr.bf16.gmra.mxu0 %v273
    %v517 = vpop.f32.mrf.mxu0
    %v518 = vadd.f32 %v129, %v517
    %v519 = vpop.f32.mrf.mxu0
    %v520 = vpop.f32.mrf.mxu0
    %v521 = vadd.f32 %v129, %v520
    %v522 = vpop.f32.mrf.mxu0
    %523 = vmatprep.mubr.bf16.mxu0 0
    %524 = vmatmul.mubr.bf16.gmra.mxu0 %v274
    %v525 = vpop.f32.mrf.mxu0
    %v526 = vadd.f32 %v129, %v525
    %v527 = vpop.f32.mrf.mxu0
    %v528 = vpop.f32.mrf.mxu0
    %v529 = vadd.f32 %v129, %v528
    %v530 = vpop.f32.mrf.mxu0
    %531 = vmatprep.mubr.bf16.mxu0 0
    %532 = vmatmul.mubr.bf16.gmra.mxu0 %v275
    %v533 = vpop.f32.mrf.mxu0
    %v534 = vadd.f32 %v129, %v533
    %v535 = vpop.f32.mrf.mxu0
    %v536 = vpop.f32.mrf.mxu0
    %v537 = vadd.f32 %v129, %v536
    %v538 = vpop.f32.mrf.mxu0
    %539 = vmatprep.mubr.bf16.mxu0 0
    %540 = vmatmul.mubr.bf16.gmra.mxu0 %v276
    %v541 = vpop.f32.mrf.mxu0
    %v542 = vadd.f32 %v129, %v541
    %v543 = vpop.f32.mrf.mxu0
    %v544 = vpop.f32.mrf.mxu0
    %v545 = vadd.f32 %v129, %v544
    %v546 = vpop.f32.mrf.mxu0
    %547 = vmatprep.mubr.bf16.mxu0 0
    %548 = vmatmul.mubr.bf16.gmra.mxu0 %v277
    %v549 = vpop.f32.mrf.mxu0
    %v550 = vadd.f32 %v129, %v549
    %v551 = vpop.f32.mrf.mxu0
    %v552 = vpop.f32.mrf.mxu0
    %v553 = vadd.f32 %v129, %v552
    %v554 = vpop.f32.mrf.mxu0
    %555 = vmatprep.mubr.bf16.mxu0 0
    %556 = vmatmul.mubr.bf16.gmra.mxu0 %v278
    %v557 = vpop.f32.mrf.mxu0
    %v558 = vadd.f32 %v129, %v557
    %v559 = vpop.f32.mrf.mxu0
    %v560 = vpop.f32.mrf.mxu0
    %v561 = vadd.f32 %v129, %v560
    %v562 = vpop.f32.mrf.mxu0
    %563 = vmatprep.mubr.bf16.mxu0 0
    %564 = vmatmul.mubr.bf16.gmra.mxu0 %v279
    %v565 = vpop.f32.mrf.mxu0
    %v566 = vadd.f32 %v129, %v565
    %v567 = vpop.f32.mrf.mxu0
    %v568 = vpop.f32.mrf.mxu0
    %v569 = vadd.f32 %v129, %v568
    %v570 = vpop.f32.mrf.mxu0
    %571 = vmatprep.mubr.bf16.mxu0 0
    %572 = vmatmul.mubr.bf16.gmra.mxu0 %v280
    %v573 = vpop.f32.mrf.mxu0
    %v574 = vadd.f32 %v129, %v573
    %v575 = vpop.f32.mrf.mxu0
    %v576 = vpop.f32.mrf.mxu0
    %v577 = vadd.f32 %v129, %v576
    %v578 = vpop.f32.mrf.mxu0
    %579 = vmatprep.mubr.bf16.mxu0 0
    %580 = vmatmul.mubr.bf16.gmra.mxu0 %v281
    %v581 = vpop.f32.mrf.mxu0
    %v582 = vadd.f32 %v129, %v581
    %v583 = vpop.f32.mrf.mxu0
    %v584 = vpop.f32.mrf.mxu0
    %v585 = vadd.f32 %v129, %v584
    %v586 = vpop.f32.mrf.mxu0
    %587 = vmatprep.mubr.bf16.mxu0 0
    %588 = vmatmul.mubr.bf16.gmra.mxu0 %v282
    %v589 = vpop.f32.mrf.mxu0
    %v590 = vadd.f32 %v129, %v589
    %v591 = vpop.f32.mrf.mxu0
    %v592 = vpop.f32.mrf.mxu0
    %v593 = vadd.f32 %v129, %v592
    %v594 = vpop.f32.mrf.mxu0
    %595 = vmatprep.mubr.bf16.mxu0 0
    %596 = vmatmul.mubr.bf16.gmra.mxu0 %v283
    %v597 = vpop.f32.mrf.mxu0
    %v598 = vadd.f32 %v129, %v597
    %v599 = vpop.f32.mrf.mxu0
    %v600 = vpop.f32.mrf.mxu0
    %v601 = vadd.f32 %v129, %v600
    %v602 = vpop.f32.mrf.mxu0
    %603 = vmatprep.mubr.bf16.mxu0 0
    %604 = vmatmul.mubr.bf16.gmra.mxu0 %v284
    %v605 = vpop.f32.mrf.mxu0
    %v606 = vadd.f32 %v129, %v605
    %v607 = vpop.f32.mrf.mxu0
    %v608 = vpop.f32.mrf.mxu0
    %v609 = vadd.f32 %v129, %v608
    %v610 = vpop.f32.mrf.mxu0
    %611 = vmatprep.mubr.bf16.mxu0 0
    %612 = vmatmul.mubr.bf16.gmra.mxu0 %v285
    %v613 = vpop.f32.mrf.mxu0
    %v614 = vadd.f32 %v129, %v613
    %v615 = vpop.f32.mrf.mxu0
    %v616 = vpop.f32.mrf.mxu0
    %v617 = vadd.f32 %v129, %v616
    %v618 = vpop.f32.mrf.mxu0
    %619 = vmatprep.mubr.bf16.mxu0 0
    %620 = vmatmul.mubr.bf16.gmra.mxu0 %v286
    %v621 = vpop.f32.mrf.mxu0
    %v622 = vadd.f32 %v129, %v621
    %v623 = vpop.f32.mrf.mxu0
    %v624 = vpop.f32.mrf.mxu0
    %v625 = vadd.f32 %v129, %v624
    %v626 = vpop.f32.mrf.mxu0
    %627 = vmatprep.mubr.bf16.mxu0 0
    %628 = vmatmul.mubr.bf16.gmra.mxu0 %v287
    %v629 = vpop.f32.mrf.mxu0
    %v630 = vadd.f32 %v129, %v629
    %v631 = vpop.f32.mrf.mxu0
    %v632 = vpop.f32.mrf.mxu0
    %v633 = vadd.f32 %v129, %v632
    %v634 = vpop.f32.mrf.mxu0
    %635 = vmatprep.mubr.bf16.mxu0 0
    %636 = vmatmul.mubr.bf16.gmra.mxu0 %v288
    %v637 = vpop.f32.mrf.mxu0
    %v638 = vadd.f32 %v129, %v637
    %v639 = vpop.f32.mrf.mxu0
    %v640 = vpop.f32.mrf.mxu0
    %v641 = vadd.f32 %v129, %v640
    %v642 = vpop.f32.mrf.mxu0
    %643 = vmatprep.mubr.bf16.mxu0 0
    %644 = vmatmul.mubr.bf16.gmra.mxu0 %v289
    %v645 = vpop.f32.mrf.mxu0
    %v646 = vadd.f32 %v129, %v645
    %v647 = vpop.f32.mrf.mxu0
    %v648 = vpop.f32.mrf.mxu0
    %v649 = vadd.f32 %v129, %v648
    %v650 = vpop.f32.mrf.mxu0
    %651 = vmatprep.mubr.bf16.mxu0 0
    %652 = vmatmul.mubr.bf16.gmra.mxu0 %v290
    %v653 = vpop.f32.mrf.mxu0
    %v654 = vadd.f32 %v129, %v653
    %v655 = vpop.f32.mrf.mxu0
    %v656 = vpop.f32.mrf.mxu0
    %v657 = vadd.f32 %v129, %v656
    %v658 = vpop.f32.mrf.mxu0
    %659 = vdwg.mxu0
    %vm660 = vcmp.gt.f32.partialorder %v406, 0.0
    %vm661 = vcmp.gt.f32.partialorder %v409, 0.0
    %vm662 = vcmp.gt.f32.partialorder %v414, 0.0
    %vm663 = vcmp.gt.f32.partialorder %v417, 0.0
    %vm664 = vcmp.gt.f32.partialorder %v422, 0.0
    %vm665 = vcmp.gt.f32.partialorder %v425, 0.0
    %vm666 = vcmp.gt.f32.partialorder %v430, 0.0
    %vm667 = vcmp.gt.f32.partialorder %v433, 0.0
    %vm668 = vcmp.gt.f32.partialorder %v438, 0.0
    %vm669 = vcmp.gt.f32.partialorder %v441, 0.0
    %vm670 = vcmp.gt.f32.partialorder %v446, 0.0
    %vm671 = vcmp.gt.f32.partialorder %v449, 0.0
    %vm672 = vcmp.gt.f32.partialorder %v454, 0.0
    %vm673 = vcmp.gt.f32.partialorder %v457, 0.0
    %vm674 = vcmp.gt.f32.partialorder %v462, 0.0
    %vm675 = vcmp.gt.f32.partialorder %v465, 0.0
    %vm676 = vcmp.gt.f32.partialorder %v470, 0.0
    %vm677 = vcmp.gt.f32.partialorder %v473, 0.0
    %vm678 = vcmp.gt.f32.partialorder %v478, 0.0
    %vm679 = vcmp.gt.f32.partialorder %v481, 0.0
    %vm680 = vcmp.gt.f32.partialorder %v486, 0.0
    %vm681 = vcmp.gt.f32.partialorder %v489, 0.0
    %vm682 = vcmp.gt.f32.partialorder %v494, 0.0
    %vm683 = vcmp.gt.f32.partialorder %v497, 0.0
    %vm684 = vcmp.gt.f32.partialorder %v502, 0.0
    %vm685 = vcmp.gt.f32.partialorder %v505, 0.0
    %vm686 = vcmp.gt.f32.partialorder %v510, 0.0
    %vm687 = vcmp.gt.f32.partialorder %v513, 0.0
    %vm688 = vcmp.gt.f32.partialorder %v518, 0.0
    %vm689 = vcmp.gt.f32.partialorder %v521, 0.0
    %vm690 = vcmp.gt.f32.partialorder %v526, 0.0
    %vm691 = vcmp.gt.f32.partialorder %v529, 0.0
    %vm692 = vcmp.gt.f32.partialorder %v534, 0.0
    %vm693 = vcmp.gt.f32.partialorder %v537, 0.0
    %vm694 = vcmp.gt.f32.partialorder %v542, 0.0
    %vm695 = vcmp.gt.f32.partialorder %v545, 0.0
    %vm696 = vcmp.gt.f32.partialorder %v550, 0.0
    %vm697 = vcmp.gt.f32.partialorder %v553, 0.0
    %vm698 = vcmp.gt.f32.partialorder %v558, 0.0
    %vm699 = vcmp.gt.f32.partialorder %v561, 0.0
    %vm700 = vcmp.gt.f32.partialorder %v566, 0.0
    %vm701 = vcmp.gt.f32.partialorder %v569, 0.0
    %vm702 = vcmp.gt.f32.partialorder %v574, 0.0
    %vm703 = vcmp.gt.f32.partialorder %v577, 0.0
    %vm704 = vcmp.gt.f32.partialorder %v582, 0.0
    %vm705 = vcmp.gt.f32.partialorder %v585, 0.0
    %vm706 = vcmp.gt.f32.partialorder %v590, 0.0
    %vm707 = vcmp.gt.f32.partialorder %v593, 0.0
    %vm708 = vcmp.gt.f32.partialorder %v598, 0.0
    %vm709 = vcmp.gt.f32.partialorder %v601, 0.0
    %vm710 = vcmp.gt.f32.partialorder %v606, 0.0
    %vm711 = vcmp.gt.f32.partialorder %v609, 0.0
    %vm712 = vcmp.gt.f32.partialorder %v614, 0.0
    %vm713 = vcmp.gt.f32.partialorder %v617, 0.0
    %vm714 = vcmp.gt.f32.partialorder %v622, 0.0
    %vm715 = vcmp.gt.f32.partialorder %v625, 0.0
    %vm716 = vcmp.gt.f32.partialorder %v630, 0.0
    %vm717 = vcmp.gt.f32.partialorder %v633, 0.0
    %vm718 = vcmp.gt.f32.partialorder %v638, 0.0
    %vm719 = vcmp.gt.f32.partialorder %v641, 0.0
    %vm720 = vcmp.gt.f32.partialorder %v646, 0.0
    %vm721 = vcmp.gt.f32.partialorder %v649, 0.0
    %vm722 = vcmp.gt.f32.partialorder %v654, 0.0
    %vm723 = vcmp.gt.f32.partialorder %v657, 0.0
    %v724 = vmul.f32 %v406, 0.1
    %v725 = vmul.f32 %v409, 0.1
    %v726 = vmul.f32 %v414, 0.1
    %v727 = vmul.f32 %v417, 0.1
    %v728 = vmul.f32 %v422, 0.1
    %v729 = vmul.f32 %v425, 0.1
    %v730 = vmul.f32 %v430, 0.1
    %v731 = vmul.f32 %v433, 0.1
    %v732 = vmul.f32 %v438, 0.1
    %v733 = vmul.f32 %v441, 0.1
    %v734 = vmul.f32 %v446, 0.1
    %v735 = vmul.f32 %v449, 0.1
    %v736 = vmul.f32 %v454, 0.1
    %v737 = vmul.f32 %v457, 0.1
    %v738 = vmul.f32 %v462, 0.1
    %v739 = vmul.f32 %v465, 0.1
    %v740 = vmul.f32 %v470, 0.1
    %v741 = vmul.f32 %v473, 0.1
    %v742 = vmul.f32 %v478, 0.1
    %v743 = vmul.f32 %v481, 0.1
    %v744 = vmul.f32 %v486, 0.1
    %v745 = vmul.f32 %v489, 0.1
    %v746 = vmul.f32 %v494, 0.1
    %v747 = vmul.f32 %v497, 0.1
    %v748 = vmul.f32 %v502, 0.1
    %v749 = vmul.f32 %v505, 0.1
    %v750 = vmul.f32 %v510, 0.1
    %v751 = vmul.f32 %v513, 0.1
    %v752 = vmul.f32 %v518, 0.1
    %v753 = vmul.f32 %v521, 0.1
    %v754 = vmul.f32 %v526, 0.1
    %v755 = vmul.f32 %v529, 0.1
    %v756 = vmul.f32 %v534, 0.1
    %v757 = vmul.f32 %v537, 0.1
    %v758 = vmul.f32 %v542, 0.1
    %v759 = vmul.f32 %v545, 0.1
    %v760 = vmul.f32 %v550, 0.1
    %v761 = vmul.f32 %v553, 0.1
    %v762 = vmul.f32 %v558, 0.1
    %v763 = vmul.f32 %v561, 0.1
    %v764 = vmul.f32 %v566, 0.1
    %v765 = vmul.f32 %v569, 0.1
    %v766 = vmul.f32 %v574, 0.1
    %v767 = vmul.f32 %v577, 0.1
    %v768 = vmul.f32 %v582, 0.1
    %v769 = vmul.f32 %v585, 0.1
    %v770 = vmul.f32 %v590, 0.1
    %v771 = vmul.f32 %v593, 0.1
    %v772 = vmul.f32 %v598, 0.1
    %v773 = vmul.f32 %v601, 0.1
    %v774 = vmul.f32 %v606, 0.1
    %v775 = vmul.f32 %v609, 0.1
    %v776 = vmul.f32 %v614, 0.1
    %v777 = vmul.f32 %v617, 0.1
    %v778 = vmul.f32 %v622, 0.1
    %v779 = vmul.f32 %v625, 0.1
    %v780 = vmul.f32 %v630, 0.1
    %v781 = vmul.f32 %v633, 0.1
    %v782 = vmul.f32 %v638, 0.1
    %v783 = vmul.f32 %v641, 0.1
    %v784 = vmul.f32 %v646, 0.1
    %v785 = vmul.f32 %v649, 0.1
    %v786 = vmul.f32 %v654, 0.1
    %v787 = vmul.f32 %v657, 0.1
    %v788 = vsel %vm660, %v406, %v724
    %v789 = vsel %vm661, %v409, %v725
    %v790 = vsel %vm662, %v414, %v726
    %v791 = vsel %vm663, %v417, %v727
    %v792 = vsel %vm664, %v422, %v728
    %v793 = vsel %vm665, %v425, %v729
    %v794 = vsel %vm666, %v430, %v730
    %v795 = vsel %vm667, %v433, %v731
    %v796 = vsel %vm668, %v438, %v732
    %v797 = vsel %vm669, %v441, %v733
    %v798 = vsel %vm670, %v446, %v734
    %v799 = vsel %vm671, %v449, %v735
    %v800 = vsel %vm672, %v454, %v736
    %v801 = vsel %vm673, %v457, %v737
    %v802 = vsel %vm674, %v462, %v738
    %v803 = vsel %vm675, %v465, %v739
    %v804 = vsel %vm676, %v470, %v740
    %v805 = vsel %vm677, %v473, %v741
    %v806 = vsel %vm678, %v478, %v742
    %v807 = vsel %vm679, %v481, %v743
    %v808 = vsel %vm680, %v486, %v744
    %v809 = vsel %vm681, %v489, %v745
    %v810 = vsel %vm682, %v494, %v746
    %v811 = vsel %vm683, %v497, %v747
    %v812 = vsel %vm684, %v502, %v748
    %v813 = vsel %vm685, %v505, %v749
    %v814 = vsel %vm686, %v510, %v750
    %v815 = vsel %vm687, %v513, %v751
    %v816 = vsel %vm688, %v518, %v752
    %v817 = vsel %vm689, %v521, %v753
    %v818 = vsel %vm690, %v526, %v754
    %v819 = vsel %vm691, %v529, %v755
    %v820 = vsel %vm692, %v534, %v756
    %v821 = vsel %vm693, %v537, %v757
    %v822 = vsel %vm694, %v542, %v758
    %v823 = vsel %vm695, %v545, %v759
    %v824 = vsel %vm696, %v550, %v760
    %v825 = vsel %vm697, %v553, %v761
    %v826 = vsel %vm698, %v558, %v762
    %v827 = vsel %vm699, %v561, %v763
    %v828 = vsel %vm700, %v566, %v764
    %v829 = vsel %vm701, %v569, %v765
    %v830 = vsel %vm702, %v574, %v766
    %v831 = vsel %vm703, %v577, %v767
    %v832 = vsel %vm704, %v582, %v768
    %v833 = vsel %vm705, %v585, %v769
    %v834 = vsel %vm706, %v590, %v770
    %v835 = vsel %vm707, %v593, %v771
    %v836 = vsel %vm708, %v598, %v772
    %v837 = vsel %vm709, %v601, %v773
    %v838 = vsel %vm710, %v606, %v774
    %v839 = vsel %vm711, %v609, %v775
    %v840 = vsel %vm712, %v614, %v776
    %v841 = vsel %vm713, %v617, %v777
    %v842 = vsel %vm714, %v622, %v778
    %v843 = vsel %vm715, %v625, %v779
    %v844 = vsel %vm716, %v630, %v780
    %v845 = vsel %vm717, %v633, %v781
    %v846 = vsel %vm718, %v638, %v782
    %v847 = vsel %vm719, %v641, %v783
    %v848 = vsel %vm720, %v646, %v784
    %v849 = vsel %vm721, %v649, %v785
    %v850 = vsel %vm722, %v654, %v786
    %v851 = vsel %vm723, %v657, %v787
    %852 = vst [vmem:[#allocation7] sm:$0xff] %v788
    %853 = vst [vmem:[#allocation7 + $0x8] sm:$0xff] %v789
    %854 = vst [vmem:[#allocation7 + $0x10] sm:$0xff] %v790
    %855 = vst [vmem:[#allocation7 + $0x18] sm:$0xff] %v791
    %856 = vst [vmem:[#allocation7 + $0x20] sm:$0xff] %v792
    %857 = vst [vmem:[#allocation7 + $0x28] sm:$0xff] %v793
    %858 = vst [vmem:[#allocation7 + $0x30] sm:$0xff] %v794
    %859 = vst [vmem:[#allocation7 + $0x38] sm:$0xff] %v795
    %860 = vst [vmem:[#allocation7 + $0x40] sm:$0xff] %v796
    %861 = vst [vmem:[#allocation7 + $0x48] sm:$0xff] %v797
    %862 = vst [vmem:[#allocation7 + $0x50] sm:$0xff] %v798
    %863 = vst [vmem:[#allocation7 + $0x58] sm:$0xff] %v799
    %864 = vst [vmem:[#allocation7 + $0x60] sm:$0xff] %v800
    %865 = vst [vmem:[#allocation7 + $0x68] sm:$0xff] %v801
    %866 = vst [vmem:[#allocation7 + $0x70] sm:$0xff] %v802
    %867 = vst [vmem:[#allocation7 + $0x78] sm:$0xff] %v803
    %868 = vst [vmem:[#allocation7 + $0x80] sm:$0xff] %v804
    %869 = vst [vmem:[#allocation7 + $0x88] sm:$0xff] %v805
    %870 = vst [vmem:[#allocation7 + $0x90] sm:$0xff] %v806
    %871 = vst [vmem:[#allocation7 + $0x98] sm:$0xff] %v807
    %872 = vst [vmem:[#allocation7 + $0xa0] sm:$0xff] %v808
    %873 = vst [vmem:[#allocation7 + $0xa8] sm:$0xff] %v809
    %874 = vst [vmem:[#allocation7 + $0xb0] sm:$0xff] %v810
    %875 = vst [vmem:[#allocation7 + $0xb8] sm:$0xff] %v811
    %876 = vst [vmem:[#allocation7 + $0xc0] sm:$0xff] %v812
    %877 = vst [vmem:[#allocation7 + $0xc8] sm:$0xff] %v813
    %878 = vst [vmem:[#allocation7 + $0xd0] sm:$0xff] %v814
    %879 = vst [vmem:[#allocation7 + $0xd8] sm:$0xff] %v815
    %880 = vst [vmem:[#allocation7 + $0xe0] sm:$0xff] %v816
    %881 = vst [vmem:[#allocation7 + $0xe8] sm:$0xff] %v817
    %882 = vst [vmem:[#allocation7 + $0xf0] sm:$0xff] %v818
    %883 = vst [vmem:[#allocation7 + $0xf8] sm:$0xff] %v819
    %884 = vst [vmem:[#allocation7 + $0x100] sm:$0xff] %v820
    %885 = vst [vmem:[#allocation7 + $0x108] sm:$0xff] %v821
    %886 = vst [vmem:[#allocation7 + $0x110] sm:$0xff] %v822
    %887 = vst [vmem:[#allocation7 + $0x118] sm:$0xff] %v823
    %888 = vst [vmem:[#allocation7 + $0x120] sm:$0xff] %v824
    %889 = vst [vmem:[#allocation7 + $0x128] sm:$0xff] %v825
    %890 = vst [vmem:[#allocation7 + $0x130] sm:$0xff] %v826
    %891 = vst [vmem:[#allocation7 + $0x138] sm:$0xff] %v827
    %892 = vst [vmem:[#allocation7 + $0x140] sm:$0xff] %v828
    %893 = vst [vmem:[#allocation7 + $0x148] sm:$0xff] %v829
    %894 = vst [vmem:[#allocation7 + $0x150] sm:$0xff] %v830
    %895 = vst [vmem:[#allocation7 + $0x158] sm:$0xff] %v831
    %896 = vst [vmem:[#allocation7 + $0x160] sm:$0xff] %v832
    %897 = vst [vmem:[#allocation7 + $0x168] sm:$0xff] %v833
    %898 = vst [vmem:[#allocation7 + $0x170] sm:$0xff] %v834
    %899 = vst [vmem:[#allocation7 + $0x178] sm:$0xff] %v835
    %900 = vst [vmem:[#allocation7 + $0x180] sm:$0xff] %v836
    %901 = vst [vmem:[#allocation7 + $0x188] sm:$0xff] %v837
    %902 = vst [vmem:[#allocation7 + $0x190] sm:$0xff] %v838
    %903 = vst [vmem:[#allocation7 + $0x198] sm:$0xff] %v839
    %904 = vst [vmem:[#allocation7 + $0x1a0] sm:$0xff] %v840
    %905 = vst [vmem:[#allocation7 + $0x1a8] sm:$0xff] %v841
    %906 = vst [vmem:[#allocation7 + $0x1b0] sm:$0xff] %v842
    %907 = vst [vmem:[#allocation7 + $0x1b8] sm:$0xff] %v843
    %908 = vst [vmem:[#allocation7 + $0x1c0] sm:$0xff] %v844
    %909 = vst [vmem:[#allocation7 + $0x1c8] sm:$0xff] %v845
    %910 = vst [vmem:[#allocation7 + $0x1d0] sm:$0xff] %v846
    %911 = vst [vmem:[#allocation7 + $0x1d8] sm:$0xff] %v847
    %912 = vst [vmem:[#allocation7 + $0x1e0] sm:$0xff] %v848
    %913 = vst [vmem:[#allocation7 + $0x1e8] sm:$0xff] %v849
    %914 = vst [vmem:[#allocation7 + $0x1f0] sm:$0xff] %v850
    %915 = vst [vmem:[#allocation7 + $0x1f8] sm:$0xff] %v851
    // Predicated region
    $region22: #{tpu_custom_call.1} parent=1 // pred_check
      _
    $region23: #{tpu_custom_call.1} parent=1 // pred_check_branch
      %917 = sbr.rel (0) target = $region25
    $region24: #{tpu_custom_call.1} parent=1 // pred_region
      %s919 = ssub.s32 8192, 8192
      %920 = vsyncadd [#allocation4], %s919
      %s921 = sshll.u32 [#allocation7], 4
      %s922 = int_to_ptr.vmem [resolvable:$true] %s921
      %927 = dma.vmem_to_hbm [thread:$0]  %s922, 8192, %s3, [#allocation4], 128, 128, 8
    $region25: #{tpu_custom_call.1} parent=1 // pred_fallthru
      _
    // Predicated region
    $region26: #{tpu_custom_call.1} parent=1 // pred_check
      _
    $region27: #{tpu_custom_call.1} parent=1 // pred_check_branch
      %929 = sbr.rel (0) target = $region29
    $region28: #{tpu_custom_call.1} parent=1 // pred_region
      %930 = dma.done [#allocation4], 8192
    $region29: #{tpu_custom_call.1} parent=1 // pred_fallthru
      _
    %931 = vsyncpa [#allocation3], 1
    %932 = vsyncpa [#allocation6], 1
    %933 = vsyncpa [#allocation4], 1

</llo_original>
